<compile_context>
chip_gen: v7x
topology: tpu7x:2x2x1
jax: 0.10.0
libtpu: 0.0.40
codegen_flags: <defaults>
</compile_context>

<pallas_src>
import functools

import jax
import jax.numpy as jnp
from jax.experimental import pallas as pl
from jax.experimental.pallas import tpu as pltpu


def _round_up(a, b):
    return (a + b - 1) // b * b


# ---------- Pass 1: stats only -- bf16 MXU matmul (f32 acc) + per-channel partial
# sum / sum-of-squares; one (8, Cpad) partial block per M tile ("parallel" grid) ----
def _stats_kernel(p_ref, w_ref, sum_ref, sq_ref):
    y = jnp.dot(p_ref[...], w_ref[...], preferred_element_type=jnp.float32)  # [TM, Cpad]
    # Only sublane 0 is meaningful; the broadcast keeps the store a plain full-tile vst.
    sum_ref[...] = jnp.broadcast_to(jnp.sum(y, axis=0, keepdims=True), sum_ref.shape)
    sq_ref[...] = jnp.broadcast_to(jnp.sum(y * y, axis=0, keepdims=True), sq_ref.shape)


# ---------- Pass 2: recompute conv tile + affine BN + LeakyReLU; store Cout only ----
def _conv_bn_act_kernel(p_ref, w_ref, scale_ref, shift_ref, o_ref, *, neg_slope, cout):
    y = jnp.dot(p_ref[...], w_ref[...], preferred_element_type=jnp.float32)  # [TM, Cpad]
    z = y * scale_ref[...] + shift_ref[...]
    z = jnp.where(z >= 0, z, neg_slope * z)
    o_ref[...] = z[:, :cout]          # narrow masked store: valid channels only


def _im2col(x, stride):
    """x: [N, Cin, H, W] -> patches [N*Ho*Wo, Cin*9], column order (cin, kh, kw)."""
    n, cin, h, w = x.shape
    xp = jnp.pad(x, ((0, 0), (0, 0), (1, 1), (1, 1)))
    ho = (h + 2 - 3) // stride + 1
    wo = (w + 2 - 3) // stride + 1
    cols = []
    for kh in range(3):
        for kw in range(3):
            sl = xp[:, :, kh:kh + (ho - 1) * stride + 1:stride,
                          kw:kw + (wo - 1) * stride + 1:stride]   # [N, Cin, Ho, Wo]
            cols.append(sl)
    patches = jnp.stack(cols, axis=2)                 # [N, Cin, 9, Ho, Wo]
    patches = patches.transpose(0, 3, 4, 1, 2)        # [N, Ho, Wo, Cin, 9]
    return patches.reshape(n * ho * wo, cin * 9), ho, wo


def _down_forward_impl(x, conv_w, conv_b, gamma, beta, *, stride, eps, neg_slope):
    del conv_b  # exactly cancelled by training-mode BatchNorm mean subtraction
    n, cin, h, w = x.shape
    cout = conv_w.shape[0]

    # bf16 patch matrix halves HBM bytes of the dominant operand; MXU accumulates f32.
    patches, ho, wo = _im2col(x.astype(jnp.bfloat16), stride)     # [M, K] bf16
    m, k = patches.shape

    kpad = _round_up(k, 16)            # bf16 sublane packing for the [K, C] weight
    cpad = _round_up(cout, 128)        # lane-dense MXU feed
    tm = 1024 if m >= 1024 else _round_up(m, 8)
    mpad = _round_up(m, tm)
    nt = mpad // tm
    grid = (nt,)

    patches = jnp.pad(patches, ((0, mpad - m), (0, kpad - k)))
    w_mat = conv_w.reshape(cout, k).T.astype(jnp.float32)         # [K, Cout]
    w_mat = jnp.pad(w_mat, ((0, kpad - k), (0, cpad - cout))).astype(jnp.bfloat16)

    # ---- Pass 1: per-tile partial statistics (no activation written to HBM) ----
    sum_part, sq_part = pl.pallas_call(
        _stats_kernel,
        out_shape=(jax.ShapeDtypeStruct((nt * 8, cpad), jnp.float32),
                   jax.ShapeDtypeStruct((nt * 8, cpad), jnp.float32)),
        grid=grid,
        in_specs=[pl.BlockSpec((tm, kpad), lambda i: (i, 0)),
                  pl.BlockSpec((kpad, cpad), lambda i: (0, 0))],
        out_specs=(pl.BlockSpec((8, cpad), lambda i: (i, 0)),
                   pl.BlockSpec((8, cpad), lambda i: (i, 0))),
        compiler_params=pltpu.CompilerParams(dimension_semantics=("parallel",)),
    )(patches, w_mat)

    # ---- Epilogue: cross-tile reduction + BN finalize (tiny: nt x 128 f32) ----
    # Zero-padded M rows contribute nothing, so divide by the true M.
    ysum = jnp.sum(sum_part.reshape(nt, 8, cpad)[:, 0, :], axis=0, keepdims=True)
    ysq = jnp.sum(sq_part.reshape(nt, 8, cpad)[:, 0, :], axis=0, keepdims=True)
    mean = ysum / m                                   # [1, Cpad]
    var = ysq / m - mean * mean                       # biased variance, as in PyTorch
    gamma_p = jnp.pad(gamma.astype(jnp.float32).reshape(1, cout),
                      ((0, 0), (0, cpad - cout)))
    beta_p = jnp.pad(beta.astype(jnp.float32).reshape(1, cout),
                     ((0, 0), (0, cpad - cout)))
    scale = gamma_p * jax.lax.rsqrt(var + eps)        # [1, Cpad]
    shift = beta_p - mean * scale                     # [1, Cpad]

    # ---- Pass 2: recompute conv tile, fuse BN + LeakyReLU, store Cout only ----
    out_flat = pl.pallas_call(
        functools.partial(_conv_bn_act_kernel, neg_slope=neg_slope, cout=cout),
        out_shape=jax.ShapeDtypeStruct((mpad, cout), jnp.float32),
        grid=grid,
        in_specs=[pl.BlockSpec((tm, kpad), lambda i: (i, 0)),
                  pl.BlockSpec((kpad, cpad), lambda i: (0, 0)),
                  pl.BlockSpec((1, cpad), lambda i: (0, 0)),
                  pl.BlockSpec((1, cpad), lambda i: (0, 0))],
        out_specs=pl.BlockSpec((tm, cout), lambda i: (i, 0)),
        compiler_params=pltpu.CompilerParams(dimension_semantics=("parallel",)),
    )(patches, w_mat, scale, shift)

    # [Mpad, Cout] -> [M, Cout] -> [N, Ho, Wo, Cout] -> NCHW (PyTorch layout).
    return out_flat[:m].reshape(n, ho, wo, cout).transpose(0, 3, 1, 2)


down_forward = jax.jit(_down_forward_impl,
                       static_argnames=("stride", "eps", "neg_slope"))


def _reference(x, conv_w, conv_b, gamma, beta, *, stride=2, eps=1e-5, neg_slope=0.2):
    y = jax.lax.conv_general_dilated(
        x.astype(jnp.float32), conv_w.astype(jnp.float32),
        window_strides=(stride, stride), padding=((1, 1), (1, 1)),
        dimension_numbers=("NCHW", "OIHW", "NCHW"),
    ) + conv_b.reshape(1, -1, 1, 1)
    mean = jnp.mean(y, axis=(0, 2, 3), keepdims=True)
    var = jnp.mean((y - mean) ** 2, axis=(0, 2, 3), keepdims=True)
    z = (y - mean) * jax.lax.rsqrt(var + eps) * gamma.reshape(1, -1, 1, 1) \
        + beta.reshape(1, -1, 1, 1)
    return jnp.where(z >= 0, z, neg_slope * z)


if __name__ == "__main__":
    # Small shapes consistent with the module: in_features=4, out_features=8,
    # batch=2, spatial=16 -> output spatial 8 (stride 2).
    key = jax.random.PRNGKey(0)
    k_x, k_w, k_b = jax.random.split(key, 3)

    N, CIN, H, W = 2, 4, 16, 16
    COUT, STRIDE = 8, 2

    x = jax.random.normal(k_x, (N, CIN, H, W), dtype=jnp.float32)
    conv_w = jax.random.normal(k_w, (COUT, CIN, 3, 3), dtype=jnp.float32) * 0.1
    conv_b = jax.random.normal(k_b, (COUT,), dtype=jnp.float32) * 0.1
    gamma = jnp.ones((COUT,), dtype=jnp.float32)    # nn.BatchNorm2d default weight
    beta = jnp.zeros((COUT,), dtype=jnp.float32)    # nn.BatchNorm2d default bias

    out = down_forward(x, conv_w, conv_b, gamma, beta,
                       stride=STRIDE, eps=1e-5, neg_slope=0.2)
    out = jax.block_until_ready(out)

    ref = _reference(x, conv_w, conv_b, gamma, beta, stride=STRIDE)
    assert out.shape == (N, COUT, H // STRIDE, W // STRIDE)
    # bf16 MXU inputs (f32 accumulation): compare at a bf16-appropriate tolerance.
    assert jnp.allclose(out, ref, atol=1e-2, rtol=1e-2), "mismatch vs JAX reference"

    print("KERNEL_OK")
</pallas_src>

<mosaic_0001>
module attributes {stable_mosaic.version = 11 : i64} {
  func.func @_stats_kernel(%arg0: i32, %arg1: memref<128x48xbf16, #tpu.memory_space<vmem>>, %arg2: memref<48x128xbf16, #tpu.memory_space<vmem>>, %arg3: memref<8x128xf32, #tpu.memory_space<vmem>>, %arg4: memref<8x128xf32, #tpu.memory_space<vmem>>) attributes {dimension_semantics = [#tpu.dimension_semantics<parallel>], iteration_bounds = array<i64: 1>, scalar_prefetch = 0 : i64, scratch_operands = 0 : i64, tpu.core_type = #tpu.core_type<tc>, window_params = [{transform_indices = @transform_0, window_bounds = array<i64: 128, 48>}, {pipeline_mode = #tpu.pipeline_mode<synchronous>, transform_indices = @transform_1, window_bounds = array<i64: 48, 128>}, {transform_indices = @transform_2, window_bounds = array<i64: 8, 128>}, {transform_indices = @transform_3, window_bounds = array<i64: 8, 128>}]} {
    %c0 = arith.constant 0 : index
    %c0_0 = arith.constant 0 : index
    %0 = vector.load %arg1[%c0, %c0_0] : memref<128x48xbf16, #tpu.memory_space<vmem>>, vector<128x48xbf16>
    %c0_1 = arith.constant 0 : index
    %c0_2 = arith.constant 0 : index
    %1 = vector.load %arg2[%c0_1, %c0_2] : memref<48x128xbf16, #tpu.memory_space<vmem>>, vector<48x128xbf16>
    %cst = arith.constant dense<0.000000e+00> : vector<128x128xf32>
    %2 = tpu.matmul %0, %1, %cst {dimension_numbers = #tpu.dot_dimension_numbers<[1], [0], [0], [1], [0, 0, 1, 1], [], []>} : vector<128x48xbf16>, vector<48x128xbf16>, vector<128x128xf32> -> vector<128x128xf32>
    %cst_3 = arith.constant dense<0.000000e+00> : vector<128xf32>
    %3 = vector.multi_reduction <add>, %2, %cst_3 [0] : vector<128x128xf32> to vector<128xf32>
    %4 = vector.shape_cast %3 : vector<128xf32> to vector<1x128xf32>
    %5 = vector.shape_cast %4 : vector<1x128xf32> to vector<1x128xf32>
    %6 = vector.broadcast %5 : vector<1x128xf32> to vector<8x128xf32>
    %c0_4 = arith.constant 0 : index
    %c0_5 = arith.constant 0 : index
    %7 = vector.load %arg3[%c0_4, %c0_5] : memref<8x128xf32, #tpu.memory_space<vmem>>, vector<8x128xf32>
    tpu.vector_store %arg3[%c0_4, %c0_5], %6 {strides = array<i32>} : memref<8x128xf32, #tpu.memory_space<vmem>>, vector<8x128xf32>,
    %8 = arith.mulf %2, %2 : vector<128x128xf32>
    %cst_6 = arith.constant dense<0.000000e+00> : vector<128xf32>
    %9 = vector.multi_reduction <add>, %8, %cst_6 [0] : vector<128x128xf32> to vector<128xf32>
    %10 = vector.shape_cast %9 : vector<128xf32> to vector<1x128xf32>
    %11 = vector.shape_cast %10 : vector<1x128xf32> to vector<1x128xf32>
    %12 = vector.broadcast %11 : vector<1x128xf32> to vector<8x128xf32>
    %c0_7 = arith.constant 0 : index
    %c0_8 = arith.constant 0 : index
    %13 = vector.load %arg4[%c0_7, %c0_8] : memref<8x128xf32, #tpu.memory_space<vmem>>, vector<8x128xf32>
    tpu.vector_store %arg4[%c0_7, %c0_8], %12 {strides = array<i32>} : memref<8x128xf32, #tpu.memory_space<vmem>>, vector<8x128xf32>,
    return
  }
  func.func @transform_0(%arg0: i32) -> (i32, i32) {
    %c0_i32 = arith.constant 0 : i32
    %c0_i32_0 = arith.constant 0 : i32
    return %arg0, %c0_i32 : i32, i32
  }
  func.func @transform_1(%arg0: i32) -> (i32, i32) {
    %c0_i32 = arith.constant 0 : i32
    %c0_i32_0 = arith.constant 0 : i32
    %c0_i32_1 = arith.constant 0 : i32
    return %c0_i32, %c0_i32_0 : i32, i32
  }
  func.func @transform_2(%arg0: i32) -> (i32, i32) {
    %c0_i32 = arith.constant 0 : i32
    %c0_i32_0 = arith.constant 0 : i32
    return %arg0, %c0_i32 : i32, i32
  }
  func.func @transform_3(%arg0: i32) -> (i32, i32) {
    %c0_i32 = arith.constant 0 : i32
    %c0_i32_0 = arith.constant 0 : i32
    return %arg0, %c0_i32 : i32, i32
  }
}

module attributes {stable_mosaic.version = 11 : i64} {
  func.func @_conv_bn_act_kernel(%arg0: i32, %arg1: memref<128x48xbf16, #tpu.memory_space<vmem>>, %arg2: memref<48x128xbf16, #tpu.memory_space<vmem>>, %arg3: memref<1x128xf32, #tpu.memory_space<vmem>>, %arg4: memref<1x128xf32, #tpu.memory_space<vmem>>, %arg5: memref<128x8xf32, #tpu.memory_space<vmem>>) attributes {dimension_semantics = [#tpu.dimension_semantics<parallel>], iteration_bounds = array<i64: 1>, scalar_prefetch = 0 : i64, scratch_operands = 0 : i64, tpu.core_type = #tpu.core_type<tc>, window_params = [{transform_indices = @transform_0, window_bounds = array<i64: 128, 48>}, {pipeline_mode = #tpu.pipeline_mode<synchronous>, transform_indices = @transform_1, window_bounds = array<i64: 48, 128>}, {pipeline_mode = #tpu.pipeline_mode<synchronous>, transform_indices = @transform_2, window_bounds = array<i64: 1, 128>}, {pipeline_mode = #tpu.pipeline_mode<synchronous>, transform_indices = @transform_3, window_bounds = array<i64: 1, 128>}, {transform_indices = @transform_4, window_bounds = array<i64: 128, 8>}]} {
    %c0 = arith.constant 0 : index
    %c0_0 = arith.constant 0 : index
    %0 = vector.load %arg1[%c0, %c0_0] : memref<128x48xbf16, #tpu.memory_space<vmem>>, vector<128x48xbf16>
    %c0_1 = arith.constant 0 : index
    %c0_2 = arith.constant 0 : index
    %1 = vector.load %arg2[%c0_1, %c0_2] : memref<48x128xbf16, #tpu.memory_space<vmem>>, vector<48x128xbf16>
    %cst = arith.constant dense<0.000000e+00> : vector<128x128xf32>
    %2 = tpu.matmul %0, %1, %cst {dimension_numbers = #tpu.dot_dimension_numbers<[1], [0], [0], [1], [0, 0, 1, 1], [], []>} : vector<128x48xbf16>, vector<48x128xbf16>, vector<128x128xf32> -> vector<128x128xf32>
    %c0_3 = arith.constant 0 : index
    %c0_4 = arith.constant 0 : index
    %3 = vector.load %arg3[%c0_3, %c0_4] : memref<1x128xf32, #tpu.memory_space<vmem>>, vector<1x128xf32>
    %4 = vector.broadcast %3 : vector<1x128xf32> to vector<128x128xf32>
    %5 = arith.mulf %2, %4 : vector<128x128xf32>
    %c0_5 = arith.constant 0 : index
    %c0_6 = arith.constant 0 : index
    %6 = vector.load %arg4[%c0_5, %c0_6] : memref<1x128xf32, #tpu.memory_space<vmem>>, vector<1x128xf32>
    %7 = vector.broadcast %6 : vector<1x128xf32> to vector<128x128xf32>
    %8 = arith.addf %5, %7 : vector<128x128xf32>
    %cst_7 = arith.constant 0.000000e+00 : f32
    %9 = vector.broadcast %cst_7 : f32 to vector<128x128xf32>
    %10 = arith.cmpf oge, %8, %9 : vector<128x128xf32>
    %cst_8 = arith.constant 2.000000e-01 : f32
    %11 = vector.broadcast %cst_8 : f32 to vector<128x128xf32>
    %12 = arith.mulf %11, %8 : vector<128x128xf32>
    %13 = arith.select %10, %8, %12 : vector<128x128xi1>, vector<128x128xf32>
    %14 = vector.extract_strided_slice %13 {offsets = [0, 0], sizes = [128, 8], strides = [1, 1]} : vector<128x128xf32> to vector<128x8xf32>
    %c0_9 = arith.constant 0 : index
    %c0_10 = arith.constant 0 : index
    %15 = vector.load %arg5[%c0_9, %c0_10] : memref<128x8xf32, #tpu.memory_space<vmem>>, vector<128x8xf32>
    tpu.vector_store %arg5[%c0_9, %c0_10], %14 {strides = array<i32>} : memref<128x8xf32, #tpu.memory_space<vmem>>, vector<128x8xf32>,
    return
  }
  func.func @transform_0(%arg0: i32) -> (i32, i32) {
    %c0_i32 = arith.constant 0 : i32
    %c0_i32_0 = arith.constant 0 : i32
    return %arg0, %c0_i32 : i32, i32
  }
  func.func @transform_1(%arg0: i32) -> (i32, i32) {
    %c0_i32 = arith.constant 0 : i32
    %c0_i32_0 = arith.constant 0 : i32
    %c0_i32_1 = arith.constant 0 : i32
    return %c0_i32, %c0_i32_0 : i32, i32
  }
  func.func @transform_2(%arg0: i32) -> (i32, i32) {
    %c0_i32 = arith.constant 0 : i32
    %c0_i32_0 = arith.constant 0 : i32
    %c0_i32_1 = arith.constant 0 : i32
    return %c0_i32, %c0_i32_0 : i32, i32
  }
  func.func @transform_3(%arg0: i32) -> (i32, i32) {
    %c0_i32 = arith.constant 0 : i32
    %c0_i32_0 = arith.constant 0 : i32
    %c0_i32_1 = arith.constant 0 : i32
    return %c0_i32, %c0_i32_0 : i32, i32
  }
  func.func @transform_4(%arg0: i32) -> (i32, i32) {
    %c0_i32 = arith.constant 0 : i32
    %c0_i32_0 = arith.constant 0 : i32
    return %arg0, %c0_i32 : i32, i32
  }
}

</mosaic_0001>

<llo_original>
// kernel: _down_forward_impl.2
$region0: #{_down_forward_impl.2}
  #allocation0 [shape = 'u32[]', space=smem, size = 0x4, offset = 0x4, fixed_abs, tag = 'smem constant byte address 0x4 - core index']
  #allocation1 [shape = 'u32[144,128]{1,0:T(1,128)}', space=vmem, size = 0x12000, scoped, tag = 'internal scratch']
  %s0 = inlined_call_operand.vmem [shape: bf16[128,48], index: 0, kind: input, shape index: {}]
  %s1 = inlined_call_operand.vmem [shape: bf16[48,128], index: 1, kind: input, shape index: {}]
  %s2 = inlined_call_operand.vmem [shape: f32[8,128], index: 2, kind: output, shape index: {0}]
  %s3 = inlined_call_operand.vmem [shape: f32[8,128], index: 3, kind: output, shape index: {1}]
  %4 = xla_tuple %s2, %s3
  %s5 = sld [smem:[#allocation0]]
  $region26: #{_down_forward_impl.2} parent=0
    _
  %s7 = ssub.s32 1, %s5
  %s8 = scalar_select 0, %s7, %s5
  // Predicated region
  $region2: #{_down_forward_impl.2} parent=0 // pred_check
    _
  $region3: #{_down_forward_impl.2} parent=0 // pred_check_branch
    %10 = sbr.rel (0) target = $region5
  $region4: #{_down_forward_impl.2} parent=0 // pred_region
    _
  $region5: #{_down_forward_impl.2} parent=0 // pred_fallthru
    _
  // Predicated region
  $region6: #{_down_forward_impl.2} parent=0 // pred_check
    _
  $region7: #{_down_forward_impl.2} parent=0 // pred_check_branch
    %12 = sbr.rel (0) target = $region9
  $region8: #{_down_forward_impl.2} parent=0 // pred_region
    _
  $region9: #{_down_forward_impl.2} parent=0 // pred_fallthru
    _
  %v14 = vld [vmem:[%s0] sm:$0xf]
  %v15 = vld [vmem:[%s0 + $0x4] sm:$0xf]
  %v16 = vld [vmem:[%s0 + $0x8] sm:$0xf]
  %v17 = vld [vmem:[%s0 + $0xc] sm:$0xf]
  %v18 = vld [vmem:[%s0 + $0x10] sm:$0xf]
  %v19 = vld [vmem:[%s0 + $0x14] sm:$0xf]
  %v20 = vld [vmem:[%s0 + $0x18] sm:$0xf]
  %v21 = vld [vmem:[%s0 + $0x1c] sm:$0xf]
  %v22 = vld [vmem:[%s0 + $0x20] sm:$0xf]
  %v23 = vld [vmem:[%s0 + $0x24] sm:$0xf]
  %v24 = vld [vmem:[%s0 + $0x28] sm:$0xf]
  %v25 = vld [vmem:[%s0 + $0x2c] sm:$0xf]
  %v26 = vld [vmem:[%s0 + $0x30] sm:$0xf]
  %v27 = vld [vmem:[%s0 + $0x34] sm:$0xf]
  %v28 = vld [vmem:[%s0 + $0x38] sm:$0xf]
  %v29 = vld [vmem:[%s0 + $0x3c] sm:$0xf]
  %v30 = vld [vmem:[%s1] sm:$0xf]
  %v31 = vld [vmem:[%s1 + $0x4] sm:$0xf]
  %v32 = vld [vmem:[%s1 + $0x8] sm:$0xf]
  %v33 = vld [vmem:[%s1 + $0xc] sm:$0xf]
  %v34 = vld [vmem:[%s1 + $0x10] sm:$0xf]
  %v35 = vld [vmem:[%s1 + $0x14] sm:$0xf]
  %v52 = vunpack.c.l.b16 %v14
  %v53 = vunpack.c.l.b16 %v15
  %v54 = vunpack.c.l.b16 %v16
  %v55 = vunpack.c.l.b16 %v17
  %v56 = vunpack.c.l.b16 %v18
  %v57 = vunpack.c.l.b16 %v19
  %v58 = vunpack.c.l.b16 %v20
  %v59 = vunpack.c.l.b16 %v21
  %v60 = vunpack.c.l.b16 %v22
  %v61 = vunpack.c.l.b16 %v23
  %v62 = vunpack.c.l.b16 %v24
  %v63 = vunpack.c.l.b16 %v25
  %v64 = vunpack.c.l.b16 %v26
  %v65 = vunpack.c.l.b16 %v27
  %v66 = vunpack.c.l.b16 %v28
  %v67 = vunpack.c.l.b16 %v29
  %v68 = vpack.c.b16 %v53, %v52
  %v69 = vpack.c.b16 %v55, %v54
  %v70 = vpack.c.b16 %v57, %v56
  %v71 = vpack.c.b16 %v59, %v58
  %v72 = vpack.c.b16 %v61, %v60
  %v73 = vpack.c.b16 %v63, %v62
  %v74 = vpack.c.b16 %v65, %v64
  %v75 = vpack.c.b16 %v67, %v66
  %v82 = vunpack.c.l.b16 %v30
  %v83 = vunpack.c.l.b16 %v31
  %v84 = vunpack.c.l.b16 %v32
  %v85 = vunpack.c.l.b16 %v33
  %v86 = vunpack.c.l.b16 %v34
  %v87 = vunpack.c.l.b16 %v35
  %v88 = vpack.c.b16 %v83, %v82
  %v89 = vpack.c.b16 %v85, %v84
  %v90 = vpack.c.b16 %v87, %v86
  %vm94 = vcmask 392192
  %v96 = vsel %vm94, %v68, 0
  %v99 = vsel %vm94, %v69, 0
  %v102 = vsel %vm94, %v70, 0
  %v105 = vsel %vm94, %v71, 0
  %v108 = vsel %vm94, %v72, 0
  %v111 = vsel %vm94, %v73, 0
  %v114 = vsel %vm94, %v74, 0
  %v117 = vsel %vm94, %v75, 0
  %119 = vmatprep.subr.bf16.mxu0 0
  %120 = vmatpush1.bf16.msra.mxu0 %v88
  %121 = vmatprep.subr.bf16.mxu0 0
  %122 = vmatpush1.bf16.msra.mxu0 %v89
  %123 = vmatprep.subr.bf16.mxu0 0
  %124 = vmatpush1.bf16.msra.mxu0 %v90
  %125 = vmatprep.subr.bf16.mxu0 0
  %126 = vmatpush1.bf16.msra.mxu0 0
  %127 = vmatprep.subr.bf16.mxu0 0
  %128 = vmatpush1.bf16.msra.mxu0 0
  %129 = vmatprep.subr.bf16.mxu0 0
  %130 = vmatpush1.bf16.msra.mxu0 0
  %131 = vmatprep.subr.bf16.mxu0 0
  %132 = vmatpush1.bf16.msra.mxu0 0
  %133 = vmatprep.subr.bf16.mxu0 0
  %134 = vmatpush1.bf16.msra.mxu0 0
  %135 = vmatprep.subr.bf16.mxu0 0
  %136 = vmatpush1.bf16.msra.mxu0 0
  %137 = vmatprep.subr.bf16.mxu0 0
  %138 = vmatpush1.bf16.msra.mxu0 0
  %139 = vmatprep.subr.bf16.mxu0 0
  %140 = vmatpush1.bf16.msra.mxu0 0
  %141 = vmatprep.subr.bf16.mxu0 0
  %142 = vmatpush1.bf16.msra.mxu0 0
  %143 = vmatprep.subr.bf16.mxu0 0
  %144 = vmatpush1.bf16.msra.mxu0 0
  %145 = vmatprep.subr.bf16.mxu0 0
  %146 = vmatpush1.bf16.msra.mxu0 0
  %147 = vmatprep.subr.bf16.mxu0 0
  %148 = vmatpush1.bf16.msra.mxu0 0
  %149 = vmatprep.subr.bf16.mxu0 0
  %150 = vmatpush1.bf16.msra.mxu0 0
  %151 = vmatprep.mubr.bf16.mxu0 0
  %152 = vmatmul.mubr.bf16.gmra.mrb[0].mxu0 %v96
  %v153 = vpop.f32.mrb[0].mxu0
  %v154 = vadd.f32 0.0, %v153
  %v155 = vpop.f32.mrb[0].mxu0
  %v156 = vpop.f32.mrb[0].mxu0
  %v157 = vadd.f32 0.0, %v156
  %v158 = vpop.f32.mrb[0].mxu0
  %159 = vmatprep.mubr.bf16.mxu0 0
  %160 = vmatmul.mubr.bf16.gmra.mrb[0].mxu0 %v99
  %v161 = vpop.f32.mrb[0].mxu0
  %v162 = vadd.f32 0.0, %v161
  %v163 = vpop.f32.mrb[0].mxu0
  %v164 = vpop.f32.mrb[0].mxu0
  %v165 = vadd.f32 0.0, %v164
  %v166 = vpop.f32.mrb[0].mxu0
  %167 = vmatprep.mubr.bf16.mxu0 0
  %168 = vmatmul.mubr.bf16.gmra.mrb[0].mxu0 %v102
  %v169 = vpop.f32.mrb[0].mxu0
  %v170 = vadd.f32 0.0, %v169
  %v171 = vpop.f32.mrb[0].mxu0
  %v172 = vpop.f32.mrb[0].mxu0
  %v173 = vadd.f32 0.0, %v172
  %v174 = vpop.f32.mrb[0].mxu0
  %175 = vmatprep.mubr.bf16.mxu0 0
  %176 = vmatmul.mubr.bf16.gmra.mrb[0].mxu0 %v105
  %v177 = vpop.f32.mrb[0].mxu0
  %v178 = vadd.f32 0.0, %v177
  %v179 = vpop.f32.mrb[0].mxu0
  %v180 = vpop.f32.mrb[0].mxu0
  %v181 = vadd.f32 0.0, %v180
  %v182 = vpop.f32.mrb[0].mxu0
  %183 = vmatprep.mubr.bf16.mxu0 0
  %184 = vmatmul.mubr.bf16.gmra.mrb[0].mxu0 %v108
  %v185 = vpop.f32.mrb[0].mxu0
  %v186 = vadd.f32 0.0, %v185
  %v187 = vpop.f32.mrb[0].mxu0
  %v188 = vpop.f32.mrb[0].mxu0
  %v189 = vadd.f32 0.0, %v188
  %v190 = vpop.f32.mrb[0].mxu0
  %191 = vmatprep.mubr.bf16.mxu0 0
  %192 = vmatmul.mubr.bf16.gmra.mrb[0].mxu0 %v111
  %v193 = vpop.f32.mrb[0].mxu0
  %v194 = vadd.f32 0.0, %v193
  %v195 = vpop.f32.mrb[0].mxu0
  %v196 = vpop.f32.mrb[0].mxu0
  %v197 = vadd.f32 0.0, %v196
  %v198 = vpop.f32.mrb[0].mxu0
  %199 = vmatprep.mubr.bf16.mxu0 0
  %200 = vmatmul.mubr.bf16.gmra.mrb[0].mxu0 %v114
  %v201 = vpop.f32.mrb[0].mxu0
  %v202 = vadd.f32 0.0, %v201
  %v203 = vpop.f32.mrb[0].mxu0
  %v204 = vpop.f32.mrb[0].mxu0
  %v205 = vadd.f32 0.0, %v204
  %v206 = vpop.f32.mrb[0].mxu0
  %207 = vmatprep.mubr.bf16.mxu0 0
  %208 = vmatmul.mubr.bf16.gmra.mrb[0].mxu0 %v117
  %v209 = vpop.f32.mrb[0].mxu0
  %v210 = vadd.f32 0.0, %v209
  %v211 = vpop.f32.mrb[0].mxu0
  %v212 = vpop.f32.mrb[0].mxu0
  %v213 = vadd.f32 0.0, %v212
  %v214 = vpop.f32.mrb[0].mxu0
  %215 = vdwg.mxu0
  %v216 = vadd.f32 %v154, %v157
  %v217 = vadd.f32 %v216, %v162
  %v218 = vadd.f32 %v217, %v165
  %v219 = vadd.f32 %v218, %v170
  %v220 = vadd.f32 %v219, %v173
  %v221 = vadd.f32 %v220, %v178
  %v222 = vadd.f32 %v221, %v181
  %v223 = vadd.f32 %v222, %v186
  %v224 = vadd.f32 %v223, %v189
  %v225 = vadd.f32 %v224, %v194
  %v226 = vadd.f32 %v225, %v197
  %v227 = vadd.f32 %v226, %v202
  %v228 = vadd.f32 %v227, %v205
  %v229 = vadd.f32 %v228, %v210
  %v230 = vadd.f32 %v229, %v213
  %v231 = vrot.slane %v230, 4
  %v232 = vadd.f32 %v230, %v231
  %v233 = vrot.slane %v232, 2
  %v234 = vadd.f32 %v232, %v233
  %v235 = vrot.slane %v234, 1
  %v236 = vadd.f32 %v234, %v235
  %237 = vst [vmem:[%s2] sm:$0xff] %v236
  %v238 = vmul.f32 %v154, %v154
  %v239 = vmul.f32 %v157, %v157
  %v240 = vmul.f32 %v162, %v162
  %v241 = vmul.f32 %v165, %v165
  %v242 = vmul.f32 %v170, %v170
  %v243 = vmul.f32 %v173, %v173
  %v244 = vmul.f32 %v178, %v178
  %v245 = vmul.f32 %v181, %v181
  %v246 = vmul.f32 %v186, %v186
  %v247 = vmul.f32 %v189, %v189
  %v248 = vmul.f32 %v194, %v194
  %v249 = vmul.f32 %v197, %v197
  %v250 = vmul.f32 %v202, %v202
  %v251 = vmul.f32 %v205, %v205
  %v252 = vmul.f32 %v210, %v210
  %v253 = vmul.f32 %v213, %v213
  %v254 = vadd.f32 %v238, %v239
  %v255 = vadd.f32 %v254, %v240
  %v256 = vadd.f32 %v255, %v241
  %v257 = vadd.f32 %v256, %v242
  %v258 = vadd.f32 %v257, %v243
  %v259 = vadd.f32 %v258, %v244
  %v260 = vadd.f32 %v259, %v245
  %v261 = vadd.f32 %v260, %v246
  %v262 = vadd.f32 %v261, %v247
  %v263 = vadd.f32 %v262, %v248
  %v264 = vadd.f32 %v263, %v249
  %v265 = vadd.f32 %v264, %v250
  %v266 = vadd.f32 %v265, %v251
  %v267 = vadd.f32 %v266, %v252
  %v268 = vadd.f32 %v267, %v253
  %v269 = vrot.slane %v268, 4
  %v270 = vadd.f32 %v268, %v269
  %v271 = vrot.slane %v270, 2
  %v272 = vadd.f32 %v270, %v271
  %v273 = vrot.slane %v272, 1
  %v274 = vadd.f32 %v272, %v273
  %275 = vst [vmem:[%s3] sm:$0xff] %v274
  // Predicated region
  $region10: #{_down_forward_impl.2} parent=0 // pred_check
    _
  $region11: #{_down_forward_impl.2} parent=0 // pred_check_branch
    %277 = sbr.rel (0) target = $region13
  $region12: #{_down_forward_impl.2} parent=0 // pred_region
    _
  $region13: #{_down_forward_impl.2} parent=0 // pred_fallthru
    _
  // Predicated region
  $region14: #{_down_forward_impl.2} parent=0 // pred_check
    _
  $region15: #{_down_forward_impl.2} parent=0 // pred_check_branch
    %279 = sbr.rel (0) target = $region17
  $region16: #{_down_forward_impl.2} parent=0 // pred_region
    _
  $region17: #{_down_forward_impl.2} parent=0 // pred_fallthru
    _
  // Predicated region
  $region18: #{_down_forward_impl.2} parent=0 // pred_check
    _
  $region19: #{_down_forward_impl.2} parent=0 // pred_check_branch
    %281 = sbr.rel (0) target = $region21
  $region20: #{_down_forward_impl.2} parent=0 // pred_region
    _
  $region21: #{_down_forward_impl.2} parent=0 // pred_fallthru
    _
  // Predicated region
  $region22: #{_down_forward_impl.2} parent=0 // pred_check
    _
  $region23: #{_down_forward_impl.2} parent=0 // pred_check_branch
    %283 = sbr.rel (0) target = $region25
  $region24: #{_down_forward_impl.2} parent=0 // pred_region
    _
  $region25: #{_down_forward_impl.2} parent=0 // pred_fallthru
    _

// kernel: _down_forward_impl.3
$region0: #{_down_forward_impl.3}
  #allocation0 [shape = 'u32[]', space=smem, size = 0x4, offset = 0x4, fixed_abs, tag = 'smem constant byte address 0x4 - core index']
  #allocation1 [shape = 'u32[144,128]{1,0:T(1,128)}', space=vmem, size = 0x12000, scoped, tag = 'internal scratch']
  %s0 = inlined_call_operand.vmem [shape: bf16[128,48], index: 0, kind: input, shape index: {}]
  %s1 = inlined_call_operand.vmem [shape: bf16[48,128], index: 1, kind: input, shape index: {}]
  %s2 = inlined_call_operand.vmem [shape: f32[1,128], index: 2, kind: input, shape index: {}]
  %s3 = inlined_call_operand.vmem [shape: f32[1,128], index: 3, kind: input, shape index: {}]
  %s4 = inlined_call_operand.vmem [shape: f32[128,8], index: 4, kind: output, shape index: {}]
  %s5 = sld [smem:[#allocation0]]
  $region26: #{_down_forward_impl.3} parent=0
    _
  %s7 = ssub.s32 1, %s5
  %s8 = scalar_select 0, %s7, %s5
  // Predicated region
  $region2: #{_down_forward_impl.3} parent=0 // pred_check
    _
  $region3: #{_down_forward_impl.3} parent=0 // pred_check_branch
    %10 = sbr.rel (0) target = $region5
  $region4: #{_down_forward_impl.3} parent=0 // pred_region
    _
  $region5: #{_down_forward_impl.3} parent=0 // pred_fallthru
    _
  // Predicated region
  $region6: #{_down_forward_impl.3} parent=0 // pred_check
    _
  $region7: #{_down_forward_impl.3} parent=0 // pred_check_branch
    %12 = sbr.rel (0) target = $region9
  $region8: #{_down_forward_impl.3} parent=0 // pred_region
    _
  $region9: #{_down_forward_impl.3} parent=0 // pred_fallthru
    _
  // Predicated region
  $region10: #{_down_forward_impl.3} parent=0 // pred_check
    _
  $region11: #{_down_forward_impl.3} parent=0 // pred_check_branch
    %14 = sbr.rel (0) target = $region13
  $region12: #{_down_forward_impl.3} parent=0 // pred_region
    _
  $region13: #{_down_forward_impl.3} parent=0 // pred_fallthru
    _
  // Predicated region
  $region14: #{_down_forward_impl.3} parent=0 // pred_check
    _
  $region15: #{_down_forward_impl.3} parent=0 // pred_check_branch
    %16 = sbr.rel (0) target = $region17
  $region16: #{_down_forward_impl.3} parent=0 // pred_region
    _
  $region17: #{_down_forward_impl.3} parent=0 // pred_fallthru
    _
  %v18 = vld [vmem:[%s0] sm:$0xf]
  %v19 = vld [vmem:[%s0 + $0x4] sm:$0xf]
  %v20 = vld [vmem:[%s0 + $0x8] sm:$0xf]
  %v21 = vld [vmem:[%s0 + $0xc] sm:$0xf]
  %v22 = vld [vmem:[%s0 + $0x10] sm:$0xf]
  %v23 = vld [vmem:[%s0 + $0x14] sm:$0xf]
  %v24 = vld [vmem:[%s0 + $0x18] sm:$0xf]
  %v25 = vld [vmem:[%s0 + $0x1c] sm:$0xf]
  %v26 = vld [vmem:[%s0 + $0x20] sm:$0xf]
  %v27 = vld [vmem:[%s0 + $0x24] sm:$0xf]
  %v28 = vld [vmem:[%s0 + $0x28] sm:$0xf]
  %v29 = vld [vmem:[%s0 + $0x2c] sm:$0xf]
  %v30 = vld [vmem:[%s0 + $0x30] sm:$0xf]
  %v31 = vld [vmem:[%s0 + $0x34] sm:$0xf]
  %v32 = vld [vmem:[%s0 + $0x38] sm:$0xf]
  %v33 = vld [vmem:[%s0 + $0x3c] sm:$0xf]
  %v34 = vld [vmem:[%s1] sm:$0xf]
  %v35 = vld [vmem:[%s1 + $0x4] sm:$0xf]
  %v36 = vld [vmem:[%s1 + $0x8] sm:$0xf]
  %v37 = vld [vmem:[%s1 + $0xc] sm:$0xf]
  %v38 = vld [vmem:[%s1 + $0x10] sm:$0xf]
  %v39 = vld [vmem:[%s1 + $0x14] sm:$0xf]
  %v56 = vunpack.c.l.b16 %v18
  %v57 = vunpack.c.l.b16 %v19
  %v58 = vunpack.c.l.b16 %v20
  %v59 = vunpack.c.l.b16 %v21
  %v60 = vunpack.c.l.b16 %v22
  %v61 = vunpack.c.l.b16 %v23
  %v62 = vunpack.c.l.b16 %v24
  %v63 = vunpack.c.l.b16 %v25
  %v64 = vunpack.c.l.b16 %v26
  %v65 = vunpack.c.l.b16 %v27
  %v66 = vunpack.c.l.b16 %v28
  %v67 = vunpack.c.l.b16 %v29
  %v68 = vunpack.c.l.b16 %v30
  %v69 = vunpack.c.l.b16 %v31
  %v70 = vunpack.c.l.b16 %v32
  %v71 = vunpack.c.l.b16 %v33
  %v72 = vpack.c.b16 %v57, %v56
  %v73 = vpack.c.b16 %v59, %v58
  %v74 = vpack.c.b16 %v61, %v60
  %v75 = vpack.c.b16 %v63, %v62
  %v76 = vpack.c.b16 %v65, %v64
  %v77 = vpack.c.b16 %v67, %v66
  %v78 = vpack.c.b16 %v69, %v68
  %v79 = vpack.c.b16 %v71, %v70
  %v86 = vunpack.c.l.b16 %v34
  %v87 = vunpack.c.l.b16 %v35
  %v88 = vunpack.c.l.b16 %v36
  %v89 = vunpack.c.l.b16 %v37
  %v90 = vunpack.c.l.b16 %v38
  %v91 = vunpack.c.l.b16 %v39
  %v92 = vpack.c.b16 %v87, %v86
  %v93 = vpack.c.b16 %v89, %v88
  %v94 = vpack.c.b16 %v91, %v90
  %vm98 = vcmask 392192
  %v100 = vsel %vm98, %v72, 0
  %v103 = vsel %vm98, %v73, 0
  %v106 = vsel %vm98, %v74, 0
  %v109 = vsel %vm98, %v75, 0
  %v112 = vsel %vm98, %v76, 0
  %v115 = vsel %vm98, %v77, 0
  %v118 = vsel %vm98, %v78, 0
  %v121 = vsel %vm98, %v79, 0
  %123 = vmatprep.subr.bf16.mxu0 0
  %124 = vmatpush1.bf16.msra.mxu0 %v92
  %125 = vmatprep.subr.bf16.mxu0 0
  %126 = vmatpush1.bf16.msra.mxu0 %v93
  %127 = vmatprep.subr.bf16.mxu0 0
  %128 = vmatpush1.bf16.msra.mxu0 %v94
  %129 = vmatprep.subr.bf16.mxu0 0
  %130 = vmatpush1.bf16.msra.mxu0 0
  %131 = vmatprep.subr.bf16.mxu0 0
  %132 = vmatpush1.bf16.msra.mxu0 0
  %133 = vmatprep.subr.bf16.mxu0 0
  %134 = vmatpush1.bf16.msra.mxu0 0
  %135 = vmatprep.subr.bf16.mxu0 0
  %136 = vmatpush1.bf16.msra.mxu0 0
  %137 = vmatprep.subr.bf16.mxu0 0
  %138 = vmatpush1.bf16.msra.mxu0 0
  %139 = vmatprep.subr.bf16.mxu0 0
  %140 = vmatpush1.bf16.msra.mxu0 0
  %141 = vmatprep.subr.bf16.mxu0 0
  %142 = vmatpush1.bf16.msra.mxu0 0
  %143 = vmatprep.subr.bf16.mxu0 0
  %144 = vmatpush1.bf16.msra.mxu0 0
  %145 = vmatprep.subr.bf16.mxu0 0
  %146 = vmatpush1.bf16.msra.mxu0 0
  %147 = vmatprep.subr.bf16.mxu0 0
  %148 = vmatpush1.bf16.msra.mxu0 0
  %149 = vmatprep.subr.bf16.mxu0 0
  %150 = vmatpush1.bf16.msra.mxu0 0
  %151 = vmatprep.subr.bf16.mxu0 0
  %152 = vmatpush1.bf16.msra.mxu0 0
  %153 = vmatprep.subr.bf16.mxu0 0
  %154 = vmatpush1.bf16.msra.mxu0 0
  %155 = vmatprep.mubr.bf16.mxu0 0
  %156 = vmatmul.mubr.bf16.gmra.mrb[0].mxu0 %v100
  %v157 = vpop.f32.mrb[0].mxu0
  %v158 = vadd.f32 0.0, %v157
  %v159 = vpop.f32.mrb[0].mxu0
  %v160 = vpop.f32.mrb[0].mxu0
  %v161 = vadd.f32 0.0, %v160
  %v162 = vpop.f32.mrb[0].mxu0
  %163 = vmatprep.mubr.bf16.mxu0 0
  %164 = vmatmul.mubr.bf16.gmra.mrb[0].mxu0 %v103
  %v165 = vpop.f32.mrb[0].mxu0
  %v166 = vadd.f32 0.0, %v165
  %v167 = vpop.f32.mrb[0].mxu0
  %v168 = vpop.f32.mrb[0].mxu0
  %v169 = vadd.f32 0.0, %v168
  %v170 = vpop.f32.mrb[0].mxu0
  %171 = vmatprep.mubr.bf16.mxu0 0
  %172 = vmatmul.mubr.bf16.gmra.mrb[0].mxu0 %v106
  %v173 = vpop.f32.mrb[0].mxu0
  %v174 = vadd.f32 0.0, %v173
  %v175 = vpop.f32.mrb[0].mxu0
  %v176 = vpop.f32.mrb[0].mxu0
  %v177 = vadd.f32 0.0, %v176
  %v178 = vpop.f32.mrb[0].mxu0
  %179 = vmatprep.mubr.bf16.mxu0 0
  %180 = vmatmul.mubr.bf16.gmra.mrb[0].mxu0 %v109
  %v181 = vpop.f32.mrb[0].mxu0
  %v182 = vadd.f32 0.0, %v181
  %v183 = vpop.f32.mrb[0].mxu0
  %v184 = vpop.f32.mrb[0].mxu0
  %v185 = vadd.f32 0.0, %v184
  %v186 = vpop.f32.mrb[0].mxu0
  %187 = vmatprep.mubr.bf16.mxu0 0
  %188 = vmatmul.mubr.bf16.gmra.mrb[0].mxu0 %v112
  %v189 = vpop.f32.mrb[0].mxu0
  %v190 = vadd.f32 0.0, %v189
  %v191 = vpop.f32.mrb[0].mxu0
  %v192 = vpop.f32.mrb[0].mxu0
  %v193 = vadd.f32 0.0, %v192
  %v194 = vpop.f32.mrb[0].mxu0
  %195 = vmatprep.mubr.bf16.mxu0 0
  %196 = vmatmul.mubr.bf16.gmra.mrb[0].mxu0 %v115
  %v197 = vpop.f32.mrb[0].mxu0
  %v198 = vadd.f32 0.0, %v197
  %v199 = vpop.f32.mrb[0].mxu0
  %v200 = vpop.f32.mrb[0].mxu0
  %v201 = vadd.f32 0.0, %v200
  %v202 = vpop.f32.mrb[0].mxu0
  %203 = vmatprep.mubr.bf16.mxu0 0
  %204 = vmatmul.mubr.bf16.gmra.mrb[0].mxu0 %v118
  %v205 = vpop.f32.mrb[0].mxu0
  %v206 = vadd.f32 0.0, %v205
  %v207 = vpop.f32.mrb[0].mxu0
  %v208 = vpop.f32.mrb[0].mxu0
  %v209 = vadd.f32 0.0, %v208
  %v210 = vpop.f32.mrb[0].mxu0
  %211 = vmatprep.mubr.bf16.mxu0 0
  %212 = vmatmul.mubr.bf16.gmra.mrb[0].mxu0 %v121
  %v213 = vpop.f32.mrb[0].mxu0
  %v214 = vadd.f32 0.0, %v213
  %v215 = vpop.f32.mrb[0].mxu0
  %v216 = vpop.f32.mrb[0].mxu0
  %v217 = vadd.f32 0.0, %v216
  %v218 = vpop.f32.mrb[0].mxu0
  %219 = vdwg.mxu0
  %v220 = vld [vmem:[%s2] sm:$0x1]
  %v222 = vlaneseq
  %v223 = vshrl.u32 %v222, 7
  %v224 = vsub.s32 0, %v223
  %v225 = vrot.slane %v220, %v224
  %v227 = vmul.f32 %v158, %v225
  %v228 = vmul.f32 %v161, %v225
  %v229 = vmul.f32 %v166, %v225
  %v230 = vmul.f32 %v169, %v225
  %v231 = vmul.f32 %v174, %v225
  %v232 = vmul.f32 %v177, %v225
  %v233 = vmul.f32 %v182, %v225
  %v234 = vmul.f32 %v185, %v225
  %v235 = vmul.f32 %v190, %v225
  %v236 = vmul.f32 %v193, %v225
  %v237 = vmul.f32 %v198, %v225
  %v238 = vmul.f32 %v201, %v225
  %v239 = vmul.f32 %v206, %v225
  %v240 = vmul.f32 %v209, %v225
  %v241 = vmul.f32 %v214, %v225
  %v242 = vmul.f32 %v217, %v225
  %v243 = vld [vmem:[%s3] sm:$0x1]
  %v245 = vlaneseq
  %v246 = vshrl.u32 %v245, 7
  %v247 = vsub.s32 0, %v246
  %v248 = vrot.slane %v243, %v247
  %v250 = vadd.f32 %v227, %v248
  %v251 = vadd.f32 %v228, %v248
  %v252 = vadd.f32 %v229, %v248
  %v253 = vadd.f32 %v230, %v248
  %v254 = vadd.f32 %v231, %v248
  %v255 = vadd.f32 %v232, %v248
  %v256 = vadd.f32 %v233, %v248
  %v257 = vadd.f32 %v234, %v248
  %v258 = vadd.f32 %v235, %v248
  %v259 = vadd.f32 %v236, %v248
  %v260 = vadd.f32 %v237, %v248
  %v261 = vadd.f32 %v238, %v248
  %v262 = vadd.f32 %v239, %v248
  %v263 = vadd.f32 %v240, %v248
  %v264 = vadd.f32 %v241, %v248
  %v265 = vadd.f32 %v242, %v248
  %vm266 = vcmp.ge.f32.partialorder %v250, 0.0
  %vm267 = vcmp.ge.f32.partialorder %v251, 0.0
  %vm268 = vcmp.ge.f32.partialorder %v252, 0.0
  %vm269 = vcmp.ge.f32.partialorder %v253, 0.0
  %vm270 = vcmp.ge.f32.partialorder %v254, 0.0
  %vm271 = vcmp.ge.f32.partialorder %v255, 0.0
  %vm272 = vcmp.ge.f32.partialorder %v256, 0.0
  %vm273 = vcmp.ge.f32.partialorder %v257, 0.0
  %vm274 = vcmp.ge.f32.partialorder %v258, 0.0
  %vm275 = vcmp.ge.f32.partialorder %v259, 0.0
  %vm276 = vcmp.ge.f32.partialorder %v260, 0.0
  %vm277 = vcmp.ge.f32.partialorder %v261, 0.0
  %vm278 = vcmp.ge.f32.partialorder %v262, 0.0
  %vm279 = vcmp.ge.f32.partialorder %v263, 0.0
  %vm280 = vcmp.ge.f32.partialorder %v264, 0.0
  %vm281 = vcmp.ge.f32.partialorder %v265, 0.0
  %v282 = vmul.f32 %v250, 0.2
  %v283 = vmul.f32 %v251, 0.2
  %v284 = vmul.f32 %v252, 0.2
  %v285 = vmul.f32 %v253, 0.2
  %v286 = vmul.f32 %v254, 0.2
  %v287 = vmul.f32 %v255, 0.2
  %v288 = vmul.f32 %v256, 0.2
  %v289 = vmul.f32 %v257, 0.2
  %v290 = vmul.f32 %v258, 0.2
  %v291 = vmul.f32 %v259, 0.2
  %v292 = vmul.f32 %v260, 0.2
  %v293 = vmul.f32 %v261, 0.2
  %v294 = vmul.f32 %v262, 0.2
  %v295 = vmul.f32 %v263, 0.2
  %v296 = vmul.f32 %v264, 0.2
  %v297 = vmul.f32 %v265, 0.2
  %v298 = vsel %vm266, %v250, %v282
  %v299 = vsel %vm267, %v251, %v283
  %v300 = vsel %vm268, %v252, %v284
  %v301 = vsel %vm269, %v253, %v285
  %v302 = vsel %vm270, %v254, %v286
  %v303 = vsel %vm271, %v255, %v287
  %v304 = vsel %vm272, %v256, %v288
  %v305 = vsel %vm273, %v257, %v289
  %v306 = vsel %vm274, %v258, %v290
  %v307 = vsel %vm275, %v259, %v291
  %v308 = vsel %vm276, %v260, %v292
  %v309 = vsel %vm277, %v261, %v293
  %v310 = vsel %vm278, %v262, %v294
  %v311 = vsel %vm279, %v263, %v295
  %v312 = vsel %vm280, %v264, %v296
  %v313 = vsel %vm281, %v265, %v297
  %vm314 = vcmask 64512
  %315 = vst.msk [vmem:[%s4] sm:$0xff] %vm314, %v298
  %316 = vst.msk [vmem:[%s4 + $0x8] sm:$0xff] %vm314, %v299
  %317 = vst.msk [vmem:[%s4 + $0x10] sm:$0xff] %vm314, %v300
  %318 = vst.msk [vmem:[%s4 + $0x18] sm:$0xff] %vm314, %v301
  %319 = vst.msk [vmem:[%s4 + $0x20] sm:$0xff] %vm314, %v302
  %320 = vst.msk [vmem:[%s4 + $0x28] sm:$0xff] %vm314, %v303
  %321 = vst.msk [vmem:[%s4 + $0x30] sm:$0xff] %vm314, %v304
  %322 = vst.msk [vmem:[%s4 + $0x38] sm:$0xff] %vm314, %v305
  %323 = vst.msk [vmem:[%s4 + $0x40] sm:$0xff] %vm314, %v306
  %324 = vst.msk [vmem:[%s4 + $0x48] sm:$0xff] %vm314, %v307
  %325 = vst.msk [vmem:[%s4 + $0x50] sm:$0xff] %vm314, %v308
  %326 = vst.msk [vmem:[%s4 + $0x58] sm:$0xff] %vm314, %v309
  %327 = vst.msk [vmem:[%s4 + $0x60] sm:$0xff] %vm314, %v310
  %328 = vst.msk [vmem:[%s4 + $0x68] sm:$0xff] %vm314, %v311
  %329 = vst.msk [vmem:[%s4 + $0x70] sm:$0xff] %vm314, %v312
  %330 = vst.msk [vmem:[%s4 + $0x78] sm:$0xff] %vm314, %v313
  // Predicated region
  $region18: #{_down_forward_impl.3} parent=0 // pred_check
    _
  $region19: #{_down_forward_impl.3} parent=0 // pred_check_branch
    %332 = sbr.rel (0) target = $region21
  $region20: #{_down_forward_impl.3} parent=0 // pred_region
    _
  $region21: #{_down_forward_impl.3} parent=0 // pred_fallthru
    _
  // Predicated region
  $region22: #{_down_forward_impl.3} parent=0 // pred_check
    _
  $region23: #{_down_forward_impl.3} parent=0 // pred_check_branch
    %334 = sbr.rel (0) target = $region25
  $region24: #{_down_forward_impl.3} parent=0 // pred_region
    _
  $region25: #{_down_forward_impl.3} parent=0 // pred_fallthru
    _

</llo_original>
